<compile_context>
chip_gen: v7x
topology: tpu7x:2x2x1
jax: 0.10.0
libtpu: 0.0.40
codegen_flags: <defaults>
</compile_context>

<pallas_src>
import jax
import jax.numpy as jnp
from jax.experimental import pallas as pl
from jax.experimental.pallas import tpu as pltpu

EPS = 1e-5


# ---------------------------------------------------------------------------
# Small helpers: tiling, alignment, VMEM budget.
# ---------------------------------------------------------------------------
def _round_up(v, m):
    return ((v + m - 1) // m) * m


def _sublane_align(dtype):
    """Sublane alignment for the second-minor dim: 8 (f32), 16 (bf16), 32 (int8)."""
    return max(8, 32 // jnp.dtype(dtype).itemsize)


def _tile_and_pad(total, cap, align):
    """Pick a row tile (multiple of `align`, <= max(cap, align)) and the padded total.

    Never falls back to an arbitrarily large full-extent block; if no aligned
    divisor exists the caller zero-pads `total` up to a multiple of the tile.
    """
    cap = max(align, (cap // align) * align)
    if total <= cap:
        t = _round_up(total, align)
        return t, t
    t = cap
    while t >= align:                       # largest aligned divisor <= cap
        if total % t == 0:
            return t, total
        t -= align
    return cap, _round_up(total, cap)       # no divisor: pad to a multiple of cap


def _vmem_info():
    """(per-pass VMEM working budget, physical VMEM capacity or None)."""
    try:
        cap = getattr(pltpu.get_tpu_info(), "vmem_capacity_bytes", None)
    except Exception:
        cap = None
    budget = (cap // 4) if cap else (24 << 20)   # 16 MiB on v7x, 32 MiB on v5e/v6e
    return budget, cap


def _compiler_params(dimension_semantics, budget, vmem_cap):
    limit = int(2.5 * budget)
    limit = min(limit, (vmem_cap - (4 << 20)) if vmem_cap else (48 << 20))
    return pltpu.CompilerParams(dimension_semantics=dimension_semantics,
                                vmem_limit_bytes=limit)


# ---------------------------------------------------------------------------
# Pass 1: per-channel sum / sum-of-squares over row tiles (BN batch stats).
# Grid = (ncores, tiles_per_core); outer axis "parallel" so v7x's two
# TensorCores each accumulate their own (1, 1, C) partial.
# ---------------------------------------------------------------------------
def bn_stats_kernel(x_ref, sum_ref, sq_ref):
    @pl.when(pl.program_id(1) == 0)
    def _():
        sum_ref[...] = jnp.zeros_like(sum_ref)
        sq_ref[...] = jnp.zeros_like(sq_ref)

    c = x_ref.shape[-1]
    x = x_ref[...].astype(jnp.float32)
    sum_ref[...] += jnp.sum(x, axis=0, keepdims=True).reshape(1, 1, c)
    sq_ref[...] += jnp.sum(x * x, axis=0, keepdims=True).reshape(1, 1, c)


# ---------------------------------------------------------------------------
# Pass 2: folded BN (scale/shift, with the 0.25 pool factor pre-folded) + ReLU
# on all four 2x2 pool taps, summed in registers, then one 1x1-conv matmul per
# row tile on the pooled activations.  No VMEM accumulator, no inner grid axis.
# ---------------------------------------------------------------------------
def transition_apply_kernel(x_ref, s_ref, t_ref, w_ref, b_ref, o_ref):
    s = s_ref[...]                      # (1, C) f32, includes the 0.25 pool factor
    t = t_ref[...]                      # (1, C) f32, includes the 0.25 pool factor

    pooled = jnp.maximum(x_ref[0].astype(jnp.float32) * s + t, 0.0)
    for p in range(1, 4):               # static unroll over the 2x2 pool taps
        pooled = pooled + jnp.maximum(x_ref[p].astype(jnp.float32) * s + t, 0.0)

    # 1x1 conv == channel matmul on the MXU; operands in the weight dtype
    # (bf16 weights -> bf16 MXU path), accumulation in f32.
    z = jnp.dot(pooled.astype(w_ref.dtype), w_ref[...],
                preferred_element_type=jnp.float32)
    o_ref[...] = (z + b_ref[...]).astype(o_ref.dtype)


# ---------------------------------------------------------------------------
# Wrapper.
# ---------------------------------------------------------------------------
def transition_block_encode(x_nchw, gamma, beta, w, b, *,
                            row_tile_cap=None, compute_dtype=None):
    """TransitionBlock('encode') forward.

    x_nchw: (N, C, H, W); gamma/beta: (C,); w: (C, K) (PyTorch Conv2d weight
    (K, C, 1, 1) transposed/squeezed); b: (K,).  Returns (N, K, H//2, W//2).

    compute_dtype: staging dtype for activations/weights (e.g. jnp.bfloat16
    for HBM-bound speed); accumulation stays f32.  Default: input dtype.
    """
    N, C, H, W = x_nchw.shape
    assert H % 2 == 0 and W % 2 == 0, "AvgPool2d(2,2) needs even H and W"
    Ho, Wo = H // 2, W // 2
    K = w.shape[1]
    M = N * Ho * Wo                      # pooled pixels
    count = N * H * W                    # BN reduction count
    out_dtype = x_nchw.dtype

    compute_dtype = jnp.dtype(x_nchw.dtype if compute_dtype is None else compute_dtype)
    align = _sublane_align(compute_dtype)
    budget, vmem_cap = _vmem_info()

    # Lane-dense output channels: pad K to a multiple of 128 (unmasked stores,
    # full MXU N dim); real DenseNet widths already satisfy this (no-op).
    Kp = max(128, _round_up(K, 128))
    w_p = w.astype(compute_dtype)
    b_p = b.astype(jnp.float32)
    if Kp != K:
        w_p = jnp.pad(w_p, ((0, 0), (0, Kp - K)))
        b_p = jnp.pad(b_p, ((0, Kp - K),))
    b_p = b_p.reshape(1, Kp)

    # Single fused layout change: NCHW -> pool-tap-major (4, M, C), channels
    # last, staged in compute_dtype.
    x_tap = jnp.transpose(
        x_nchw.reshape(N, C, Ho, 2, Wo, 2), (3, 5, 0, 2, 4, 1)
    ).reshape(4, M, C).astype(compute_dtype)

    # ---- pass 1: BN batch statistics (two-core parallel row split) ----
    x_flat = x_tap.reshape(4 * M, C)
    stats_per_row = 2 * C * compute_dtype.itemsize + 8 * C     # dbl-buffered in + f32 temps
    stats_cap = max(align, min(4096, budget // max(stats_per_row, 1)))
    if row_tile_cap is not None:
        stats_cap = min(stats_cap, row_tile_cap)
    ts, ms_pad = _tile_and_pad(4 * M, stats_cap, align)
    x_stats = x_flat if ms_pad == 4 * M else jnp.pad(x_flat, ((0, ms_pad - 4 * M), (0, 0)))
    n_tiles = ms_pad // ts
    ncores = 2 if n_tiles % 2 == 0 else 1
    tiles_per_core = n_tiles // ncores

    ssum, ssq = pl.pallas_call(
        bn_stats_kernel,
        out_shape=(jax.ShapeDtypeStruct((ncores, 1, C), jnp.float32),
                   jax.ShapeDtypeStruct((ncores, 1, C), jnp.float32)),
        grid=(ncores, tiles_per_core),
        in_specs=[pl.BlockSpec((ts, C), lambda c, i: (c * tiles_per_core + i, 0))],
        out_specs=(pl.BlockSpec((1, 1, C), lambda c, i: (c, 0, 0)),
                   pl.BlockSpec((1, 1, C), lambda c, i: (c, 0, 0))),
        compiler_params=_compiler_params(("parallel", "arbitrary"), budget, vmem_cap),
    )(x_stats)

    total_sum = jnp.sum(ssum, axis=0).reshape(1, C)
    total_sq = jnp.sum(ssq, axis=0).reshape(1, C)
    mean = total_sum / count
    var = jnp.maximum(total_sq / count - mean * mean, 0.0)     # biased var, clamped >= 0
    scale = gamma.reshape(1, C).astype(jnp.float32) * jax.lax.rsqrt(var + EPS)
    shift = beta.reshape(1, C).astype(jnp.float32) - mean * scale
    # Fold the 2x2 average-pool 1/4 into the BN affine (ReLU is positively
    # homogeneous: relu(0.25*(x*s+t)) == 0.25*relu(x*s+t)).
    scale = scale * 0.25
    shift = shift * 0.25

    # ---- pass 2: normalize/ReLU, pool (unrolled taps), 1x1 conv ----
    apply_per_row = (2 * 4 * C * compute_dtype.itemsize          # dbl-buffered (4,tm,C) in
                     + 2 * Kp * jnp.dtype(out_dtype).itemsize    # dbl-buffered (tm,Kp) out
                     + 4 * C)                                    # f32 pooled temp
    apply_cap = max(align, min(2048, budget // max(apply_per_row, 1)))
    if row_tile_cap is not None:
        apply_cap = min(apply_cap, row_tile_cap)
    tm, m_pad = _tile_and_pad(M, apply_cap, align)
    if m_pad != M:
        x_tap = jnp.pad(x_tap, ((0, 0), (0, m_pad - M), (0, 0)))

    out2d = pl.pallas_call(
        transition_apply_kernel,
        out_shape=jax.ShapeDtypeStruct((m_pad, Kp), out_dtype),
        grid=(m_pad // tm,),
        in_specs=[
            pl.BlockSpec((4, tm, C), lambda i: (0, i, 0)),   # all 4 taps, rows i
            pl.BlockSpec((1, C), lambda i: (0, 0)),          # folded BN scale (incl. 0.25)
            pl.BlockSpec((1, C), lambda i: (0, 0)),          # folded BN shift (incl. 0.25)
            pl.BlockSpec((C, Kp), lambda i: (0, 0)),         # conv weight
            pl.BlockSpec((1, Kp), lambda i: (0, 0)),         # conv bias (f32)
        ],
        out_specs=pl.BlockSpec((tm, Kp), lambda i: (i, 0)),
        compiler_params=_compiler_params(("parallel",), budget, vmem_cap),
    )(x_tap, scale, shift, w_p, b_p)

    out = out2d[:M, :K].reshape(N, Ho, Wo, K)
    return jnp.transpose(out, (0, 3, 1, 2))                   # back to NCHW


def reference_encode(x, gamma, beta, w, b):
    """Plain-JAX reference matching PyTorch TransitionBlock('encode') forward."""
    mean = jnp.mean(x, axis=(0, 2, 3), keepdims=True)
    var = jnp.mean((x - mean) ** 2, axis=(0, 2, 3), keepdims=True)
    xn = (x - mean) / jnp.sqrt(var + EPS)
    y = xn * gamma.reshape(1, -1, 1, 1) + beta.reshape(1, -1, 1, 1)
    r = jnp.maximum(y, 0.0)
    z = jnp.einsum("nchw,ck->nkhw", r, w) + b.reshape(1, -1, 1, 1)
    N, K, H, W = z.shape
    z = z.reshape(N, K, H // 2, 2, W // 2, 2)
    return z.mean(axis=(3, 5))


if __name__ == "__main__":
    # TransitionBlock(in_channels=4, c_rate=0.5, mode='encode') -> out_channels=2
    N, C, H, W = 2, 4, 16, 16
    c_rate = 0.5
    K = int(c_rate * C)

    key = jax.random.PRNGKey(0)
    kx, kg, kb, kw, kbias = jax.random.split(key, 5)

    x = jax.random.normal(kx, (N, C, H, W), dtype=jnp.float32)
    gamma = 1.0 + 0.1 * jax.random.normal(kg, (C,), dtype=jnp.float32)
    beta = 0.1 * jax.random.normal(kb, (C,), dtype=jnp.float32)
    # PyTorch Conv2d weight is (K, C, 1, 1); our matmul layout is (C, K).
    w = 0.5 * jax.random.normal(kw, (C, K), dtype=jnp.float32)
    b = 0.1 * jax.random.normal(kbias, (K,), dtype=jnp.float32)

    ref = reference_encode(x, gamma, beta, w, b)

    # Small row-tile cap so the multi-tile grid and the two-core stats split
    # are exercised at this toy shape (real sizes use the VMEM-derived cap).
    out = transition_block_encode(x, gamma, beta, w, b, row_tile_cap=32)
    out = jax.block_until_ready(out)
    assert out.shape == (N, K, H // 2, W // 2), out.shape
    assert jnp.allclose(out, ref, atol=1e-4, rtol=1e-4), \
        float(jnp.max(jnp.abs(out - ref)))

    # bf16 staging path (HBM-bound speed path); f32 accumulation throughout,
    # so a loose tolerance vs. the f32 reference is sufficient.
    out_bf16 = transition_block_encode(x, gamma, beta, w, b, row_tile_cap=32,
                                       compute_dtype=jnp.bfloat16)
    out_bf16 = jax.block_until_ready(out_bf16)
    assert jnp.allclose(out_bf16.astype(jnp.float32), ref, atol=5e-2, rtol=5e-2), \
        float(jnp.max(jnp.abs(out_bf16.astype(jnp.float32) - ref)))

    print("KERNEL_OK")
</pallas_src>

<mosaic_0001>
module attributes {stable_mosaic.version = 11 : i64} {
  func.func @bn_stats_kernel(%arg0: i32, %arg1: i32, %arg2: memref<32x4xf32, #tpu.memory_space<vmem>>, %arg3: memref<1x1x4xf32, #tpu.memory_space<vmem>>, %arg4: memref<1x1x4xf32, #tpu.memory_space<vmem>>) attributes {dimension_semantics = [#tpu.dimension_semantics<parallel>, #tpu.dimension_semantics<arbitrary>], iteration_bounds = array<i64: 2, 8>, scalar_prefetch = 0 : i64, scratch_operands = 0 : i64, tpu.core_type = #tpu.core_type<tc>, window_params = [{transform_indices = @transform_0, window_bounds = array<i64: 32, 4>}, {transform_indices = @transform_1, window_bounds = array<i64: 1, 1, 4>}, {transform_indices = @transform_2, window_bounds = array<i64: 1, 1, 4>}]} {
    %c0_i32 = arith.constant 0 : i32
    %0 = arith.cmpi eq, %arg1, %c0_i32 : i32
    %1 = arith.extui %0 : i1 to i32
    %c0_i32_0 = arith.constant 0 : i32
    %2 = arith.cmpi ne, %1, %c0_i32_0 : i32
    scf.if %2 {
      %cst_15 = arith.constant 0.000000e+00 : f32
      %17 = vector.broadcast %cst_15 : f32 to vector<1x1x4xf32>
      %c0_16 = arith.constant 0 : index
      %c0_17 = arith.constant 0 : index
      %c0_18 = arith.constant 0 : index
      %18 = vector.load %arg3[%c0_16, %c0_17, %c0_18] : memref<1x1x4xf32, #tpu.memory_space<vmem>>, vector<1x1x4xf32>
      tpu.vector_store %arg3[%c0_16, %c0_17, %c0_18], %17 {strides = array<i32>} : memref<1x1x4xf32, #tpu.memory_space<vmem>>, vector<1x1x4xf32>,
      %cst_19 = arith.constant 0.000000e+00 : f32
      %19 = vector.broadcast %cst_19 : f32 to vector<1x1x4xf32>
      %c0_20 = arith.constant 0 : index
      %c0_21 = arith.constant 0 : index
      %c0_22 = arith.constant 0 : index
      %20 = vector.load %arg4[%c0_20, %c0_21, %c0_22] : memref<1x1x4xf32, #tpu.memory_space<vmem>>, vector<1x1x4xf32>
      tpu.vector_store %arg4[%c0_20, %c0_21, %c0_22], %19 {strides = array<i32>} : memref<1x1x4xf32, #tpu.memory_space<vmem>>, vector<1x1x4xf32>,
    } else {
    }
    %c0 = arith.constant 0 : index
    %c0_1 = arith.constant 0 : index
    %3 = vector.load %arg2[%c0, %c0_1] : memref<32x4xf32, #tpu.memory_space<vmem>>, vector<32x4xf32>
    %c0_2 = arith.constant 0 : index
    %c0_3 = arith.constant 0 : index
    %c0_4 = arith.constant 0 : index
    %4 = vector.load %arg3[%c0_2, %c0_3, %c0_4] : memref<1x1x4xf32, #tpu.memory_space<vmem>>, vector<1x1x4xf32>
    %cst = arith.constant dense<0.000000e+00> : vector<4xf32>
    %5 = vector.multi_reduction <add>, %3, %cst [0] : vector<32x4xf32> to vector<4xf32>
    %6 = vector.shape_cast %5 : vector<4xf32> to vector<1x4xf32>
    %7 = vector.shape_cast %6 : vector<1x4xf32> to vector<1x1x4xf32>
    %8 = arith.addf %4, %7 : vector<1x1x4xf32>
    %c0_5 = arith.constant 0 : index
    %c0_6 = arith.constant 0 : index
    %c0_7 = arith.constant 0 : index
    %9 = vector.load %arg3[%c0_5, %c0_6, %c0_7] : memref<1x1x4xf32, #tpu.memory_space<vmem>>, vector<1x1x4xf32>
    tpu.vector_store %arg3[%c0_5, %c0_6, %c0_7], %8 {strides = array<i32>} : memref<1x1x4xf32, #tpu.memory_space<vmem>>, vector<1x1x4xf32>,
    %c0_8 = arith.constant 0 : index
    %c0_9 = arith.constant 0 : index
    %c0_10 = arith.constant 0 : index
    %10 = vector.load %arg4[%c0_8, %c0_9, %c0_10] : memref<1x1x4xf32, #tpu.memory_space<vmem>>, vector<1x1x4xf32>
    %11 = arith.mulf %3, %3 : vector<32x4xf32>
    %cst_11 = arith.constant dense<0.000000e+00> : vector<4xf32>
    %12 = vector.multi_reduction <add>, %11, %cst_11 [0] : vector<32x4xf32> to vector<4xf32>
    %13 = vector.shape_cast %12 : vector<4xf32> to vector<1x4xf32>
    %14 = vector.shape_cast %13 : vector<1x4xf32> to vector<1x1x4xf32>
    %15 = arith.addf %10, %14 : vector<1x1x4xf32>
    %c0_12 = arith.constant 0 : index
    %c0_13 = arith.constant 0 : index
    %c0_14 = arith.constant 0 : index
    %16 = vector.load %arg4[%c0_12, %c0_13, %c0_14] : memref<1x1x4xf32, #tpu.memory_space<vmem>>, vector<1x1x4xf32>
    tpu.vector_store %arg4[%c0_12, %c0_13, %c0_14], %15 {strides = array<i32>} : memref<1x1x4xf32, #tpu.memory_space<vmem>>, vector<1x1x4xf32>,
    return
  }
  func.func @transform_0(%arg0: i32, %arg1: i32) -> (i32, i32) {
    %c8_i32 = arith.constant 8 : i32
    %0 = arith.muli %arg0, %c8_i32 : i32
    %1 = arith.addi %0, %arg1 : i32
    %c0_i32 = arith.constant 0 : i32
    %c0_i32_0 = arith.constant 0 : i32
    return %1, %c0_i32 : i32, i32
  }
  func.func @transform_1(%arg0: i32, %arg1: i32) -> (i32, i32, i32) {
    %c0_i32 = arith.constant 0 : i32
    %c0_i32_0 = arith.constant 0 : i32
    %c0_i32_1 = arith.constant 0 : i32
    return %arg0, %c0_i32, %c0_i32_0 : i32, i32, i32
  }
  func.func @transform_2(%arg0: i32, %arg1: i32) -> (i32, i32, i32) {
    %c0_i32 = arith.constant 0 : i32
    %c0_i32_0 = arith.constant 0 : i32
    %c0_i32_1 = arith.constant 0 : i32
    return %arg0, %c0_i32, %c0_i32_0 : i32, i32, i32
  }
}

</mosaic_0001>

<llo_original>
// kernel: tpu_custom_call.1
$region0: #{tpu_custom_call.1}
  #allocation0 [shape = 'u32[]', space=smem, size = 0x4, offset = 0x4, fixed_abs, tag = 'smem constant byte address 0x4 - core index']
  #allocation1 [shape = 'u32[144,128]{1,0:T(1,128)}', space=vmem, size = 0x12000, scoped, tag = 'internal scratch']
  %s0 = inlined_call_operand.vmem [shape: f32[512,4], index: 0, kind: input, shape index: {}]
  %s1 = inlined_call_operand.hbm [shape: f32[2,1,4], index: 1, kind: output, shape index: {0}]
  %s2 = inlined_call_operand.hbm [shape: f32[2,1,4], index: 2, kind: output, shape index: {1}]
  %3 = xla_tuple %s1, %s2
  %s4 = sld [smem:[#allocation0]]
  $region49: #{tpu_custom_call.1} parent=0
    _
  %s6 = ssub.s32 1, %s4
  %s7 = scalar_select 0, %s6, %s4
  $region1: #{tpu_custom_call.1} parent=0
    #allocation2 [shape = 'u8[1024]{0}', space=vmem, size = 0x400, scoped, tag = 'output window, operand 0']
    #allocation3 [shape = 's32[2]{0}', space=sflag, size = 0x8, scoped, tag = 'scoped memory for tpu_custom_call.1']
    #allocation4 [shape = 'u8[1024]{0}', space=vmem, size = 0x400, scoped, tag = 'output window, operand 1']
    #allocation5 [shape = 's32[2]{0}', space=sflag, size = 0x8, scoped, tag = 'scoped memory for tpu_custom_call.1']
    %8 = vsyncpa [#allocation3], 0
    %s9 = scalar_lea.sflag [#allocation3], 1
    %10 = vsyncpa %s9, 0
    %11 = vsyncpa [#allocation5], 0
    %s12 = scalar_lea.sflag [#allocation5], 1
    %13 = vsyncpa %s12, 0
    loop: start=0, step=1, limit=18
    $region2: #{tpu_custom_call.1} parent=1 // loop_pre_header
      _
    $region3: #{tpu_custom_call.1} parent=1 // loop_header
      %s15 = sphi 0, %s19
      %p16 = scmp.ge.s32.totalorder %s15, 18
      %s22 = sphi 0, %s34
      %s23 = sphi 0, %s30
      %s24 = sphi 0, %s22
      %s25 = sphi 0, %s23
      %s26 = sphi 0, %s24
      %s27 = sphi 0, %s25
      %s41 = sphi 0, %s43
      %s44 = sphi 0, %s41
      %s45 = sphi 0, %s44
      %s61 = sphi 0, %s45
      %s67 = sphi 0, %s69
      %s70 = sphi 0, %s67
      %s71 = sphi 0, %s70
      %s87 = sphi 0, %s71
      %s93 = sphi 0, %s95
      %s96 = sphi 0, %s93
      %s97 = sphi 0, %s96
      %s113 = sphi 0, %s97
    $region4: #{tpu_custom_call.1} parent=1 // loop_header_branch
      %18 = sbr.rel (%p16) target = $region8
    $region5: #{tpu_custom_call.1} parent=1 // loop_body
      %s20 = ssub.s32 %s15, 1
      %s21 = ssub.s32 %s15, 2
      %s28 = sadd.s32 1, %s23
      %p29 = scmp.ge.s32.totalorder %s28, 8
      %s30 = scalar_select %p29, 0, %s28
      %s31 = sadd.s32 1, %s22
      %s32 = scalar_select %p29, %s31, %s22
      %p33 = scmp.ge.s32.totalorder %s32, 2
      %s34 = scalar_select %p33, 0, %s32
      %s35 = smul.u32 %s22, 8
      %s36 = sadd.s32 %s35, %s23
      %s37 = smul.u32 %s34, 8
      %s38 = sadd.s32 %s37, %s30
      %s39 = ssub.s32 %s36, %s38
      %p40 = scmp.eq.s32.totalorder %s39, 0
      %s42 = sadd.s32 %s41, 1
      %s43 = scalar_select %p40, %s41, %s42
      %p46 = pneg %p40
      %p47 = scmp.eq.s32.totalorder %s15, 15
      %p48 = por %p46, %p47
      %p49 = scmp.ne.s32.totalorder %s41, %s44
      %p50 = scmp.eq.s32.totalorder %s15, 0
      %p51 = por %p49, %p50
      %p52 = scmp.ne.s32.totalorder %s41, %s44
      %p53 = scmp.eq.s32.totalorder %s20, 15
      %p54 = por %p52, %p53
      %p55 = scmp.ne.s32.totalorder %s44, %s45
      %p56 = scmp.eq.s32.totalorder %s20, 0
      %p57 = por %p55, %p56
      %p58 = scmp.ne.s32.totalorder %s44, %s45
      %p59 = scmp.eq.s32.totalorder %s21, 15
      %p60 = por %p58, %p59
      %p62 = scmp.ne.s32.totalorder %s45, %s61
      %p63 = scmp.eq.s32.totalorder %s21, 0
      %p64 = por %p62, %p63
      %s65 = ssub.s32 %s22, %s34
      %p66 = scmp.eq.s32.totalorder %s65, 0
      %s68 = sadd.s32 %s67, 1
      %s69 = scalar_select %p66, %s67, %s68
      %p72 = pneg %p66
      %p73 = scmp.eq.s32.totalorder %s15, 15
      %p74 = por %p72, %p73
      %p75 = scmp.ne.s32.totalorder %s67, %s70
      %p76 = scmp.eq.s32.totalorder %s15, 0
      %p77 = por %p75, %p76
      %p78 = scmp.ne.s32.totalorder %s67, %s70
      %p79 = scmp.eq.s32.totalorder %s20, 15
      %p80 = por %p78, %p79
      %p81 = scmp.ne.s32.totalorder %s70, %s71
      %p82 = scmp.eq.s32.totalorder %s20, 0
      %p83 = por %p81, %p82
      %p84 = scmp.ne.s32.totalorder %s70, %s71
      %p85 = scmp.eq.s32.totalorder %s21, 15
      %p86 = por %p84, %p85
      %p88 = scmp.ne.s32.totalorder %s71, %s87
      %p89 = scmp.eq.s32.totalorder %s21, 0
      %p90 = por %p88, %p89
      %s91 = ssub.s32 %s22, %s34
      %p92 = scmp.eq.s32.totalorder %s91, 0
      %s94 = sadd.s32 %s93, 1
      %s95 = scalar_select %p92, %s93, %s94
      %p98 = pneg %p92
      %p99 = scmp.eq.s32.totalorder %s15, 15
      %p100 = por %p98, %p99
      %p101 = scmp.ne.s32.totalorder %s93, %s96
      %p102 = scmp.eq.s32.totalorder %s15, 0
      %p103 = por %p101, %p102
      %p104 = scmp.ne.s32.totalorder %s93, %s96
      %p105 = scmp.eq.s32.totalorder %s20, 15
      %p106 = por %p104, %p105
      %p107 = scmp.ne.s32.totalorder %s96, %s97
      %p108 = scmp.eq.s32.totalorder %s20, 0
      %p109 = por %p107, %p108
      %p110 = scmp.ne.s32.totalorder %s96, %s97
      %p111 = scmp.eq.s32.totalorder %s21, 15
      %p112 = por %p110, %p111
      %p114 = scmp.ne.s32.totalorder %s97, %s113
      %p115 = scmp.eq.s32.totalorder %s21, 0
      %p116 = por %p114, %p115
      %p117 = scmp.le.s32.totalorder 1, %s15
      %p118 = scmp.lt.s32.totalorder %s15, 17
      %p119 = pnand %p117, %p118
      %p120 = pneg %p119
      // Predicated region
      $region9: #{tpu_custom_call.1} parent=5 // pred_check
        _
      $region10: #{tpu_custom_call.1} parent=5 // pred_check_branch
        %122 = sbr.rel (%p119) target = $region12
      $region11: #{tpu_custom_call.1} parent=5 // pred_region
        %s123 = ssub.s32 %s15, 1
      $region12: #{tpu_custom_call.1} parent=5 // pred_fallthru
        _
      %p124 = scmp.lt.s32.totalorder %s15, 16
      // Predicated region
      $region13: #{tpu_custom_call.1} parent=5 // pred_check
        %p125 = pneg %p124
      $region14: #{tpu_custom_call.1} parent=5 // pred_check_branch
        %127 = sbr.rel (%p125) target = $region16
      $region15: #{tpu_custom_call.1} parent=5 // pred_region
        // Predicated region
        $region17: #{tpu_custom_call.1} parent=15 // pred_check
          %p128 = pneg %p51
        $region18: #{tpu_custom_call.1} parent=15 // pred_check_branch
          %130 = sbr.rel (%p128) target = $region20
        $region19: #{tpu_custom_call.1} parent=15 // pred_region
          %s131 = smul.u32 %s22, 8
          %s132 = sadd.s32 %s131, %s23
          %s133 = smul.u32 4, %s132
          %p134 = scmp.lt.s32.totalorder %s133, 63
          %s135 = scalar_select %p134, %s133, 63
          %s136 = smul.addr %s135, 8
          %s137 = scalar_lea.vmem %s0, %s136
          %s138 = smul.u32 %s22, 8
          %s139 = sadd.s32 %s138, %s23
          %s140 = smul.u32 4, %s139
        $region20: #{tpu_custom_call.1} parent=15 // pred_fallthru
          _
      $region16: #{tpu_custom_call.1} parent=5 // pred_fallthru
        _
      %p141 = scmp.le.s32.totalorder 1, %s15
      %p142 = scmp.lt.s32.totalorder %s15, 17
      %p143 = pnand %p141, %p142
      %p144 = pneg %p143
      // Predicated region
      $region21: #{tpu_custom_call.1} parent=5 // pred_check
        _
      $region22: #{tpu_custom_call.1} parent=5 // pred_check_branch
        %146 = sbr.rel (%p143) target = $region24
      $region23: #{tpu_custom_call.1} parent=5 // pred_region
        %s147 = ssub.s32 %s15, 1
        %s148 = smul.u32 %s24, 8
        %s149 = sadd.s32 %s148, %s25
        %s150 = smul.u32 4, %s149
        %p151 = scmp.lt.s32.totalorder %s150, 63
        %s152 = scalar_select %p151, %s150, 63
        %s153 = smul.addr %s152, 8
        %s154 = scalar_lea.vmem %s0, %s153
        %p155 = pneg %p57
        %p156 = pneg %p54
        %p157 = pneg %p83
        %p158 = pneg %p80
        %s159 = sand.u32 %s70, 1
        %s160 = scalar_lea.sflag [#allocation3], %s159
        %s161 = sand.u32 %s70, 1
        %s162 = scalar_lea.vmem [#allocation2], %s161
        %p163 = pneg %p109
        %p164 = pneg %p106
        %s165 = sand.u32 %s96, 1
        %s166 = scalar_lea.sflag [#allocation5], %s165
        %s167 = sand.u32 %s96, 1
        %s168 = scalar_lea.vmem [#allocation4], %s167
        %s169 = smul.u32 %s24, 8
        %s170 = sadd.s32 %s169, %s25
        %s171 = smul.u32 4, %s170
        %p172 = scmp.lt.s32.totalorder %s171, 63
        %s173 = scalar_select %p172, %s171, 63
        %s174 = smul.addr %s173, 8
        %s175 = scalar_lea.vmem %s0, %s174
        %s176 = smul.u32 %s24, 8
        %s177 = sadd.s32 %s176, %s25
        %s178 = smul.u32 4, %s177
        %p179 = scmp.eq.s32.totalorder %s25, 0
        // Predicated region
        $region25: #{tpu_custom_call.1} parent=23 // pred_check
          %p180 = pneg %p179
        $region26: #{tpu_custom_call.1} parent=23 // pred_check_branch
          %182 = sbr.rel (%p180) target = $region28
        $region27: #{tpu_custom_call.1} parent=23 // pred_region
          %vm183 = vcmask 24576
          %184 = vst.msk [vmem:[%s162] sm:$0x1] %vm183, 0.0
          %185 = vst.msk [vmem:[%s168] sm:$0x1] %vm183, 0.0
        $region28: #{tpu_custom_call.1} parent=23 // pred_fallthru
          _
        %v186 = vld [vmem:[%s175] sm:$0xff]
        %v187 = vld [vmem:[%s175 + $0x8] sm:$0xff]
        %v188 = vld [vmem:[%s175 + $0x10] sm:$0xff]
        %v189 = vld [vmem:[%s175 + $0x18] sm:$0xff]
        %v190 = vld [vmem:[%s162] sm:$0x1]
        %vm191 = vcmask 31744
        %v192 = vsel %vm191, %v186, 0.0
        %v193 = vsel %vm191, %v187, 0.0
        %v194 = vadd.f32 %v192, %v193
        %v195 = vsel %vm191, %v188, 0.0
        %v196 = vadd.f32 %v194, %v195
        %v197 = vsel %vm191, %v189, 0.0
        %v198 = vadd.f32 %v196, %v197
        %v199 = vrot.slane %v198, 4
        %v200 = vadd.f32 %v198, %v199
        %v201 = vrot.slane %v200, 2
        %v202 = vadd.f32 %v200, %v201
        %v203 = vrot.slane %v202, 1
        %v204 = vadd.f32 %v202, %v203
        %v205 = vadd.f32 %v190, %v204
        %vm206 = vcmask 24576
        %207 = vst.msk [vmem:[%s162] sm:$0x1] %vm206, %v205
        %v208 = vld [vmem:[%s168] sm:$0x1]
        %v209 = vmul.f32 %v186, %v186
        %v210 = vmul.f32 %v187, %v187
        %v211 = vmul.f32 %v188, %v188
        %v212 = vmul.f32 %v189, %v189
        %v213 = vsel %vm191, %v209, 0.0
        %v214 = vsel %vm191, %v210, 0.0
        %v215 = vadd.f32 %v213, %v214
        %v216 = vsel %vm191, %v211, 0.0
        %v217 = vadd.f32 %v215, %v216
        %v218 = vsel %vm191, %v212, 0.0
        %v219 = vadd.f32 %v217, %v218
        %v220 = vrot.slane %v219, 4
        %v221 = vadd.f32 %v219, %v220
        %v222 = vrot.slane %v221, 2
        %v223 = vadd.f32 %v221, %v222
        %v224 = vrot.slane %v223, 1
        %v225 = vadd.f32 %v223, %v224
        %v226 = vadd.f32 %v208, %v225
        %227 = vst.msk [vmem:[%s168] sm:$0x1] %vm206, %v226
        %s228 = sand.u32 %s70, 1
        %s229 = scalar_lea.sflag [#allocation3], %s228
        %s230 = sand.u32 %s70, 1
        %s231 = scalar_lea.vmem [#allocation2], %s230
        %s232 = sand.u32 %s96, 1
        %s233 = scalar_lea.sflag [#allocation5], %s232
        %s234 = sand.u32 %s96, 1
        %s235 = scalar_lea.vmem [#allocation4], %s234
        // Predicated region
        $region29: #{tpu_custom_call.1} parent=23 // pred_check
          %p236 = pneg %p80
        $region30: #{tpu_custom_call.1} parent=23 // pred_check_branch
          %238 = sbr.rel (%p236) target = $region32
        $region31: #{tpu_custom_call.1} parent=23 // pred_region
          %s240 = ssub.s32 16, 16
          %241 = vsyncadd %s229, %s240
          %s242 = smul.addr %s24, 16
          %s243 = scalar_lea.hbm %s1, %s242
          %s245 = sshll.u32 %s231, 4
          %s246 = int_to_ptr.vmem [resolvable:$true] %s245
          %248 = dma.vmem_to_hbm [thread:$0]  %s246, 16, %s243, %s229
        $region32: #{tpu_custom_call.1} parent=23 // pred_fallthru
          _
        // Predicated region
        $region33: #{tpu_custom_call.1} parent=23 // pred_check
          %p249 = pneg %p106
        $region34: #{tpu_custom_call.1} parent=23 // pred_check_branch
          %251 = sbr.rel (%p249) target = $region36
        $region35: #{tpu_custom_call.1} parent=23 // pred_region
          %s253 = ssub.s32 16, 16
          %254 = vsyncadd %s233, %s253
          %s255 = smul.addr %s24, 16
          %s256 = scalar_lea.hbm %s2, %s255
          %s258 = sshll.u32 %s235, 4
          %s259 = int_to_ptr.vmem [resolvable:$true] %s258
          %261 = dma.vmem_to_hbm [thread:$0]  %s259, 16, %s256, %s233
        $region36: #{tpu_custom_call.1} parent=23 // pred_fallthru
          _
      $region24: #{tpu_custom_call.1} parent=5 // pred_fallthru
        _
      %p262 = scmp.le.s32.totalorder 2, %s15
      // Predicated region
      $region37: #{tpu_custom_call.1} parent=5 // pred_check
        %p263 = pneg %p262
      $region38: #{tpu_custom_call.1} parent=5 // pred_check_branch
        %265 = sbr.rel (%p263) target = $region40
      $region39: #{tpu_custom_call.1} parent=5 // pred_region
        %s266 = ssub.s32 %s15, 2
        // Predicated region
        $region41: #{tpu_custom_call.1} parent=39 // pred_check
          %p267 = pneg %p86
        $region42: #{tpu_custom_call.1} parent=39 // pred_check_branch
          %269 = sbr.rel (%p267) target = $region44
        $region43: #{tpu_custom_call.1} parent=39 // pred_region
          %s270 = sand.u32 %s71, 1
          %s271 = scalar_lea.sflag [#allocation3], %s270
          %s272 = sand.u32 %s71, 1
          %s273 = scalar_lea.vmem [#allocation2], %s272
          %274 = dma.done %s271, 16
        $region44: #{tpu_custom_call.1} parent=39 // pred_fallthru
          _
        // Predicated region
        $region45: #{tpu_custom_call.1} parent=39 // pred_check
          %p275 = pneg %p112
        $region46: #{tpu_custom_call.1} parent=39 // pred_check_branch
          %277 = sbr.rel (%p275) target = $region48
        $region47: #{tpu_custom_call.1} parent=39 // pred_region
          %s278 = sand.u32 %s97, 1
          %s279 = scalar_lea.sflag [#allocation5], %s278
          %s280 = sand.u32 %s97, 1
          %s281 = scalar_lea.vmem [#allocation4], %s280
          %282 = dma.done %s279, 16
        $region48: #{tpu_custom_call.1} parent=39 // pred_fallthru
          _
      $region40: #{tpu_custom_call.1} parent=5 // pred_fallthru
        _
    $region6: #{tpu_custom_call.1} parent=1 // loop_footer
      %s19 = sadd.s32 1, %s15
    $region7: #{tpu_custom_call.1} parent=1 // loop_footer_branch
      %14 = sbr.rel target = $region3
    $region8: #{tpu_custom_call.1} parent=1 // loop_exit
      _
    %283 = vsyncpa [#allocation3], 1
    %s284 = scalar_lea.sflag [#allocation3], 1
    %285 = vsyncpa %s284, 1
    %286 = vsyncpa [#allocation5], 1
    %s287 = scalar_lea.sflag [#allocation5], 1
    %288 = vsyncpa %s287, 1

</llo_original>
